<compile_context>
chip_gen: v6e
topology: v6e:2x2x1
jax: 0.10.0
libtpu: 0.0.40
codegen_flags: <defaults>
</compile_context>

<pallas_src>
import functools

import jax
import jax.numpy as jnp
from jax import lax
from jax.experimental import pallas as pl
from jax.experimental.pallas import tpu as pltpu

LANE = 128  # TPU lane width


def linear_kernel(x_ref, w_ref, b_ref, o_ref):
    # x: [B, IN]          activations (features on the lane axis)
    # w: [OUT_P, IN]      PyTorch nn.Linear weight layout, OUT padded to 128
    # b: [1, OUT_P]       bias, broadcast over batch
    # o: [B, OUT_P]       lane-dense output
    x = x_ref[...]
    w = w_ref[...]
    # y = x @ w.T, transpose folded into the contraction (MXU-native).
    acc = lax.dot_general(
        x, w,
        dimension_numbers=(((1,), (1,)), ((), ())),
        preferred_element_type=jnp.float32,
    )
    o_ref[...] = (acc + b_ref[...]).astype(o_ref.dtype)


@jax.jit
def simple_nn_forward(x, weight, bias):
    """y = x @ weight.T + bias  (PyTorch nn.Linear semantics).

    x:      [B, IN]   float32
    weight: [OUT, IN] float32
    bias:   [OUT]     float32
    returns [B, OUT]  float32
    """
    B, IN = x.shape
    OUT = weight.shape[0]
    OUT_P = ((OUT + LANE - 1) // LANE) * LANE  # lane-dense padded OUT

    # Trivial static padding of the small operands (8x128 f32 scale) so the
    # kernel's output last dim is a multiple of 128 (no masked partial stores).
    w_pad = jnp.pad(weight, ((0, OUT_P - OUT), (0, 0)))          # [OUT_P, IN]
    b_pad = jnp.pad(bias, (0, OUT_P - OUT)).reshape(1, OUT_P)    # [1, OUT_P]

    cost = pl.CostEstimate(
        flops=2 * B * IN * OUT_P,
        transcendentals=0,
        bytes_accessed=4 * (B * IN + OUT_P * IN + OUT_P + B * OUT_P),
    )

    y_pad = pl.pallas_call(
        linear_kernel,
        out_shape=jax.ShapeDtypeStruct((B, OUT_P), x.dtype),
        in_specs=[
            pl.BlockSpec(memory_space=pltpu.MemorySpace.VMEM),  # x
            pl.BlockSpec(memory_space=pltpu.MemorySpace.VMEM),  # weight (padded)
            pl.BlockSpec(memory_space=pltpu.MemorySpace.VMEM),  # bias (padded)
        ],
        out_specs=pl.BlockSpec(memory_space=pltpu.MemorySpace.VMEM),
        cost_estimate=cost,
    )(x, w_pad, b_pad)

    # Slice the lane padding back off (fused by jit with surrounding ops).
    return y_pad[:, :OUT]
    # TODO(synk): for throughput use, batch B up to 128-256 per call and add a
    # "parallel" batch grid axis (2 TCs on v7x); at B=8 the call is overhead-bound.


if __name__ == "__main__":
    # sklearn digits: 64 input features, 10 classes. Small batch.
    B, IN, OUT = 8, 64, 10

    key = jax.random.PRNGKey(0)
    kx, kw, kb = jax.random.split(key, 3)

    x = jax.random.normal(kx, (B, IN), dtype=jnp.float32)
    # Deterministic init mimicking nn.Linear default (uniform in +-1/sqrt(IN)).
    bound = 1.0 / jnp.sqrt(jnp.float32(IN))
    weight = jax.random.uniform(kw, (OUT, IN), minval=-bound, maxval=bound,
                                dtype=jnp.float32)
    bias = jax.random.uniform(kb, (OUT,), minval=-bound, maxval=bound,
                              dtype=jnp.float32)

    y = simple_nn_forward(x, weight, bias)
    y = jax.block_until_ready(y)

    # Reference check against plain JAX (same math as PyTorch nn.Linear).
    y_ref = x @ weight.T + bias
    assert y.shape == (B, OUT)
    assert jnp.allclose(y, y_ref, atol=1e-5, rtol=1e-5)

    print("KERNEL_OK")
</pallas_src>

<mosaic_0001>
module attributes {stable_mosaic.version = 11 : i64} {
  func.func @linear_kernel(%arg0: memref<8x64xf32, #tpu.memory_space<vmem>>, %arg1: memref<128x64xf32, #tpu.memory_space<vmem>>, %arg2: memref<1x128xf32, #tpu.memory_space<vmem>>, %arg3: memref<8x128xf32, #tpu.memory_space<vmem>>) attributes {dimension_semantics = [], scalar_prefetch = 0 : i64, scratch_operands = 0 : i64, tpu.core_type = #tpu.core_type<tc>} {
    %c0 = arith.constant 0 : index
    %c0_0 = arith.constant 0 : index
    %0 = vector.load %arg0[%c0, %c0_0] : memref<8x64xf32, #tpu.memory_space<vmem>>, vector<8x64xf32>
    %c0_1 = arith.constant 0 : index
    %c0_2 = arith.constant 0 : index
    %1 = vector.load %arg1[%c0_1, %c0_2] : memref<128x64xf32, #tpu.memory_space<vmem>>, vector<128x64xf32>
    %cst = arith.constant dense<0.000000e+00> : vector<8x128xf32>
    %2 = tpu.matmul %0, %1, %cst {dimension_numbers = #tpu.dot_dimension_numbers<[1], [1], [0], [0], [0, 0, 1, 0], [], []>} : vector<8x64xf32>, vector<128x64xf32>, vector<8x128xf32> -> vector<8x128xf32>
    %c0_3 = arith.constant 0 : index
    %c0_4 = arith.constant 0 : index
    %3 = vector.load %arg2[%c0_3, %c0_4] : memref<1x128xf32, #tpu.memory_space<vmem>>, vector<1x128xf32>
    %4 = vector.broadcast %3 : vector<1x128xf32> to vector<8x128xf32>
    %5 = arith.addf %2, %4 : vector<8x128xf32>
    %c0_5 = arith.constant 0 : index
    %c0_6 = arith.constant 0 : index
    %6 = vector.load %arg3[%c0_5, %c0_6] : memref<8x128xf32, #tpu.memory_space<vmem>>, vector<8x128xf32>
    tpu.vector_store %arg3[%c0_5, %c0_6], %5 {strides = array<i32>} : memref<8x128xf32, #tpu.memory_space<vmem>>, vector<8x128xf32>,
    return
  }
}

</mosaic_0001>

<llo_original>
// kernel: simple_nn_forward.1
$region0: #{simple_nn_forward.1}
  #allocation0 [shape = 'u32[]', space=smem, size = 0x4, offset = 0x4, fixed_abs, tag = 'smem constant byte address 0x4 - core index']
  #allocation1 [shape = 'u32[144,128]{1,0:T(1,128)}', space=vmem, size = 0x12000, scoped, tag = 'internal scratch']
  %s0 = inlined_call_operand.vmem [shape: f32[8,64], index: 0, kind: input, shape index: {}]
  %s1 = inlined_call_operand.vmem [shape: f32[128,64], index: 1, kind: input, shape index: {}]
  %s2 = inlined_call_operand.vmem [shape: f32[1,128], index: 2, kind: input, shape index: {}]
  %s3 = inlined_call_operand.hbm [shape: f32[8,128], index: 3, kind: output, shape index: {}]
  %s4 = sld [smem:[#allocation0]]
  $region22: #{simple_nn_forward.1} parent=0
    _
  %s6 = ssub.s32 1, %s4
  %s7 = scalar_select 0, %s6, %s4
  $region1: #{simple_nn_forward.1} parent=0
    #allocation2 [shape = 'u8[4096]{0}', space=vmem, size = 0x1000, scoped, tag = 'output window, operand 0, single buffered']
    #allocation3 [shape = 's32[1]{0}', space=sflag, size = 0x4, scoped, tag = 'scoped memory for simple_nn_forward.1']
    %8 = vsyncpa [#allocation3], 0
    // Predicated region
    $region2: #{simple_nn_forward.1} parent=1 // pred_check
      _
    $region3: #{simple_nn_forward.1} parent=1 // pred_check_branch
      %10 = sbr.rel (0) target = $region5
    $region4: #{simple_nn_forward.1} parent=1 // pred_region
      _
    $region5: #{simple_nn_forward.1} parent=1 // pred_fallthru
      _
    // Predicated region
    $region6: #{simple_nn_forward.1} parent=1 // pred_check
      _
    $region7: #{simple_nn_forward.1} parent=1 // pred_check_branch
      %12 = sbr.rel (0) target = $region9
    $region8: #{simple_nn_forward.1} parent=1 // pred_region
      _
    $region9: #{simple_nn_forward.1} parent=1 // pred_fallthru
      _
    // Predicated region
    $region10: #{simple_nn_forward.1} parent=1 // pred_check
      _
    $region11: #{simple_nn_forward.1} parent=1 // pred_check_branch
      %14 = sbr.rel (0) target = $region13
    $region12: #{simple_nn_forward.1} parent=1 // pred_region
      _
    $region13: #{simple_nn_forward.1} parent=1 // pred_fallthru
      _
    %v15 = vld [vmem:[%s0] sm:$0xff]
    %v16 = vld [vmem:[%s1] sm:$0xff]
    %v17 = vld [vmem:[%s1 + $0x8] sm:$0xff]
    %v18 = vld [vmem:[%s1 + $0x10] sm:$0xff]
    %v19 = vld [vmem:[%s1 + $0x18] sm:$0xff]
    %v20 = vld [vmem:[%s1 + $0x20] sm:$0xff]
    %v21 = vld [vmem:[%s1 + $0x28] sm:$0xff]
    %v22 = vld [vmem:[%s1 + $0x30] sm:$0xff]
    %v23 = vld [vmem:[%s1 + $0x38] sm:$0xff]
    %v24 = vld [vmem:[%s1 + $0x40] sm:$0xff]
    %v25 = vld [vmem:[%s1 + $0x48] sm:$0xff]
    %v26 = vld [vmem:[%s1 + $0x50] sm:$0xff]
    %v27 = vld [vmem:[%s1 + $0x58] sm:$0xff]
    %v28 = vld [vmem:[%s1 + $0x60] sm:$0xff]
    %v29 = vld [vmem:[%s1 + $0x68] sm:$0xff]
    %v30 = vld [vmem:[%s1 + $0x70] sm:$0xff]
    %v31 = vld [vmem:[%s1 + $0x78] sm:$0xff]
    %v32 = vld [vmem:[%s2] sm:$0x1]
    %v34 = vlaneseq
    %v35 = vshrl.u32 %v34, 7
    %v36 = vsub.s32 0, %v35
    %v37 = vrot.slane %v32, %v36
    %vm39 = vcmask 523264
    %v41 = vsel %vm39, %v15, 0
    %v44 = vsel %vm39, %v16, 0
    %v47 = vsel %vm39, %v17, 0
    %v50 = vsel %vm39, %v18, 0
    %v53 = vsel %vm39, %v19, 0
    %v56 = vsel %vm39, %v20, 0
    %v59 = vsel %vm39, %v21, 0
    %v62 = vsel %vm39, %v22, 0
    %v65 = vsel %vm39, %v23, 0
    %v68 = vsel %vm39, %v24, 0
    %v71 = vsel %vm39, %v25, 0
    %v74 = vsel %vm39, %v26, 0
    %v77 = vsel %vm39, %v27, 0
    %v80 = vsel %vm39, %v28, 0
    %v83 = vsel %vm39, %v29, 0
    %v86 = vsel %vm39, %v30, 0
    %v89 = vsel %vm39, %v31, 0
    %91 = vmatprep.subr.mxu0 0.0
    %92 = vmatpush1.xpose.msra.mxu0 %v89
    %93 = vmatprep.subr.mxu0 0.0
    %94 = vmatpush1.xpose.msra.mxu0 %v86
    %95 = vmatprep.subr.mxu0 0.0
    %96 = vmatpush1.xpose.msra.mxu0 %v83
    %97 = vmatprep.subr.mxu0 0.0
    %98 = vmatpush1.xpose.msra.mxu0 %v80
    %99 = vmatprep.subr.mxu0 0.0
    %100 = vmatpush1.xpose.msra.mxu0 %v77
    %101 = vmatprep.subr.mxu0 0.0
    %102 = vmatpush1.xpose.msra.mxu0 %v74
    %103 = vmatprep.subr.mxu0 0.0
    %104 = vmatpush1.xpose.msra.mxu0 %v71
    %105 = vmatprep.subr.mxu0 0.0
    %106 = vmatpush1.xpose.msra.mxu0 %v68
    %107 = vmatprep.subr.mxu0 0.0
    %108 = vmatpush1.xpose.msra.mxu0 %v65
    %109 = vmatprep.subr.mxu0 0.0
    %110 = vmatpush1.xpose.msra.mxu0 %v62
    %111 = vmatprep.subr.mxu0 0.0
    %112 = vmatpush1.xpose.msra.mxu0 %v59
    %113 = vmatprep.subr.mxu0 0.0
    %114 = vmatpush1.xpose.msra.mxu0 %v56
    %115 = vmatprep.subr.mxu0 0.0
    %116 = vmatpush1.xpose.msra.mxu0 %v53
    %117 = vmatprep.subr.mxu0 0.0
    %118 = vmatpush1.xpose.msra.mxu0 %v50
    %119 = vmatprep.subr.mxu0 0.0
    %120 = vmatpush1.xpose.msra.mxu0 %v47
    %121 = vmatprep.subr.mxu0 0.0
    %122 = vmatpush1.xpose.msra.mxu0 %v44
    %123 = vmatprep.subr.mxu0 0.0
    %124 = vmatpush2.xpose.msra.mxu0 0.0
    %125 = vmatprep.subr.mxu0 0.0
    %126 = vmatpush2.xpose.msra.mxu0 0.0
    %127 = vmatprep.subr.mxu0 0.0
    %128 = vmatpush2.xpose.msra.mxu0 0.0
    %129 = vmatprep.subr.mxu0 0.0
    %130 = vmatpush2.xpose.msra.mxu0 0.0
    %131 = vmatprep.subr.mxu0 0.0
    %132 = vmatpush2.xpose.msra.mxu0 0.0
    %133 = vmatprep.subr.mxu0 0.0
    %134 = vmatpush2.xpose.msra.mxu0 0.0
    %135 = vmatprep.subr.mxu0 0.0
    %136 = vmatpush2.xpose.msra.mxu0 0.0
    %137 = vmatprep.subr.mxu0 0.0
    %138 = vmatpush2.xpose.msra.mxu0 0.0
    %139 = vmatprep.subr.mxu0 0.0
    %140 = vmatpush2.xpose.msra.mxu0 0.0
    %141 = vmatprep.subr.mxu0 0.0
    %142 = vmatpush2.xpose.msra.mxu0 0.0
    %143 = vmatprep.subr.mxu0 0.0
    %144 = vmatpush2.xpose.msra.mxu0 0.0
    %145 = vmatprep.subr.mxu0 0.0
    %146 = vmatpush2.xpose.msra.mxu0 0.0
    %147 = vmatprep.subr.mxu0 0.0
    %148 = vmatpush2.xpose.msra.mxu0 0.0
    %149 = vmatprep.subr.mxu0 0.0
    %150 = vmatpush2.xpose.msra.mxu0 0.0
    %151 = vmatprep.subr.mxu0 0.0
    %152 = vmatpush2.xpose.msra.mxu0 0.0
    %153 = vmatprep.subr.mxu0 0.0
    %154 = vmatpush2.xpose.msra.mxu0 0.0
    %155 = vmatprep.mubr.f32.mxu0 0.0
    %156 = vmatmul.mubr.f32.gmra.mxu0 %v41
    %v157 = vpop.f32.mrf.mxu0
    %v158 = vadd.f32 %v37, %v157
    %v159 = vpop.f32.mrf.mxu0
    %160 = vdwg.mxu0
    %161 = vst [vmem:[#allocation2] sm:$0xff] %v158
    // Predicated region
    $region14: #{simple_nn_forward.1} parent=1 // pred_check
      _
    $region15: #{simple_nn_forward.1} parent=1 // pred_check_branch
      %163 = sbr.rel (0) target = $region17
    $region16: #{simple_nn_forward.1} parent=1 // pred_region
      %s165 = ssub.s32 128, 128
      %166 = vsyncadd [#allocation3], %s165
      %s168 = sshll.u32 [#allocation2], 4
      %s169 = int_to_ptr.vmem [resolvable:$true] %s168
      %171 = dma.vmem_to_hbm [thread:$0]  %s169, 128, %s3, [#allocation3]
    $region17: #{simple_nn_forward.1} parent=1 // pred_fallthru
      _
    // Predicated region
    $region18: #{simple_nn_forward.1} parent=1 // pred_check
      _
    $region19: #{simple_nn_forward.1} parent=1 // pred_check_branch
      %173 = sbr.rel (0) target = $region21
    $region20: #{simple_nn_forward.1} parent=1 // pred_region
      %174 = dma.done [#allocation3], 128
    $region21: #{simple_nn_forward.1} parent=1 // pred_fallthru
      _
    %175 = vsyncpa [#allocation3], 1

</llo_original>
